<compile_context>
chip_gen: v6e
topology: v6e:2x2x1
jax: 0.10.0
libtpu: 0.0.40
codegen_flags: <defaults>
</compile_context>

<pallas_src>
import jax
import jax.numpy as jnp
from jax import lax
from jax.experimental import pallas as pl
from jax.experimental.pallas import tpu as pltpu


def _gp_accum_kernel(alpha_ref, x_ref, y_ref, w1t_ref, z_ref, g_ref):
    """One (p, f) grid step: accumulate the z and Gram contributions of one F-tile."""
    f = pl.program_id(1)

    @pl.when(f == 0)
    def _init():
        z_ref[...] = jnp.zeros_like(z_ref)
        g_ref[...] = jnp.zeros_like(g_ref)

    # Interpolation in f32 on the VPU (inputs may be bf16-streamed).
    alpha = alpha_ref[...].astype(jnp.float32)
    x = x_ref[...].astype(jnp.float32)
    y = y_ref[...].astype(jnp.float32)
    interp = alpha * x + (1.0 - alpha) * y                      # (B, tF)

    w1t = w1t_ref[...]                                          # (tF, HID)
    interp = interp.astype(w1t.dtype)                           # MXU input dtype

    # z += interp @ W1^T  -- NN contraction thanks to the (F, HID) layout.
    z_ref[0] = z_ref[0] + lax.dot_general(
        interp, w1t, (((1,), (0,)), ((), ())),
        preferred_element_type=jnp.float32)

    # G += W1_tile @ W1_tile^T  (= w1t^T @ w1t): reuses the already-resident
    # W1 tile, so W1 crosses HBM exactly once for the whole penalty.
    g_ref[0] = g_ref[0] + lax.dot_general(
        w1t, w1t, (((0,), (0,)), ((), ())),
        preferred_element_type=jnp.float32)


def _round_up(n, m):
    return ((n + m - 1) // m) * m


def gradient_penalty(alpha, x, y, w1, b1, w2, *, block_f=4096, nsplit=2,
                     stream_dtype=jnp.float32):
    """alpha/x/y: (B, C, H, W); w1: (HID, F); b1, w2: (HID,). Returns scalar penalty."""
    B = x.shape[0]
    F = 1
    for d in x.shape[1:]:
        F *= d
    HID = w1.shape[0]

    # Lane-aligned feature tile; pad F so it divides into nsplit * nf tiles.
    block_f = min(block_f, _round_up(F, 128))
    f_pad = _round_up(F, block_f * nsplit)
    nf = f_pad // (block_f * nsplit)
    pad = f_pad - F

    def prep(a):
        a = a.reshape(B, F).astype(stream_dtype)
        return jnp.pad(a, ((0, 0), (0, pad))) if pad else a

    alpha_f = prep(alpha)
    x_f = prep(x)
    y_f = prep(y)
    # Pre-transposed W1 -> (F, HID): NN contraction for the z matmul and the
    # natural layout for the Gram accumulation (no per-tile XLU transpose).
    w1t = w1.T.astype(stream_dtype)
    if pad:
        w1t = jnp.pad(w1t, ((0, pad), (0, 0)))  # zero rows: no z / G contribution

    in_tile = lambda p, f_: (0, p * nf + f_)
    w1_tile = lambda p, f_: (p * nf + f_, 0)
    part_tile = lambda p, f_: (p, 0, 0)

    z_parts, g_parts = pl.pallas_call(
        _gp_accum_kernel,
        out_shape=(jax.ShapeDtypeStruct((nsplit, B, HID), jnp.float32),
                   jax.ShapeDtypeStruct((nsplit, HID, HID), jnp.float32)),
        grid_spec=pltpu.PrefetchScalarGridSpec(
            num_scalar_prefetch=0,
            grid=(nsplit, nf),
            in_specs=[
                pl.BlockSpec((B, block_f), in_tile),       # alpha
                pl.BlockSpec((B, block_f), in_tile),       # X
                pl.BlockSpec((B, block_f), in_tile),       # y
                pl.BlockSpec((block_f, HID), w1_tile),     # W1^T
            ],
            out_specs=[
                pl.BlockSpec((1, B, HID), part_tile),      # per-split z partial
                pl.BlockSpec((1, HID, HID), part_tile),    # per-split Gram partial
            ],
        ),
        compiler_params=pltpu.CompilerParams(
            dimension_semantics=("parallel", "arbitrary"),
            vmem_limit_bytes=32 * 1024 * 1024,
        ),
    )(alpha_f, x_f, y_f, w1t)

    # Tiny O(B*HID^2) finalize: combine per-core partials, apply the analytic
    # input-gradient formula and the penalty reduction.
    z = jnp.sum(z_parts, axis=0) + b1.astype(jnp.float32)[None, :]    # (B, HID)
    gram = jnp.sum(g_parts, axis=0)                                   # (HID, HID)
    a = jnp.tanh(z)
    dz = (1.0 - a * a) * w2.astype(jnp.float32)[None, :]              # (B, HID)
    # ||grad_i||^2 = dz_i @ (W1 W1^T) @ dz_i^T  -- grad (B, F) never formed.
    sq = jnp.einsum("bh,hk,bk->b", dz, gram, dz,
                    precision=lax.Precision.HIGHEST)
    norms = jnp.sqrt(sq)
    return jnp.mean((norms - 1.0) ** 2)


def _reference(alpha, x, y, w1, b1, w2):
    """Pure-JAX reference using autodiff, for validation."""
    B = x.shape[0]
    interp = (alpha * x + (1.0 - alpha) * y).reshape(B, -1)

    def d_sum(xf):  # grad_outputs = ones  <=>  grad of the batch-sum
        z = jnp.dot(xf, w1.T, precision=lax.Precision.HIGHEST) + b1[None, :]
        return jnp.sum(jnp.dot(jnp.tanh(z), w2, precision=lax.Precision.HIGHEST))

    g = jax.grad(d_sum)(interp)                   # (B, F)
    norms = jnp.linalg.norm(g, axis=1)
    return jnp.mean((norms - 1.0) ** 2)


if __name__ == "__main__":
    # Small shapes consistent with the module (scaled down from 3 x 512 x 512).
    B, C, H, W = 2, 3, 16, 16
    HID = 32
    F = C * H * W

    key = jax.random.PRNGKey(0)
    k_alpha, k_x, k_y, k_w1, k_b1, k_w2 = jax.random.split(key, 6)

    # alpha ~ randn (faithful to torch.randn in the module), X / real, y / fake.
    alpha = jax.random.normal(k_alpha, (B, C, H, W), dtype=jnp.float32)
    X = jax.random.normal(k_x, (B, C, H, W), dtype=jnp.float32)
    y = jax.random.normal(k_y, (B, C, H, W), dtype=jnp.float32)

    # Deterministic synthetic discriminator parameters.
    # TODO(synk): the real `Discriminator` class is undefined in the source module.
    w1 = jax.random.normal(k_w1, (HID, F), dtype=jnp.float32) * 0.05
    b1 = jax.random.normal(k_b1, (HID,), dtype=jnp.float32) * 0.05
    w2 = jax.random.normal(k_w2, (HID,), dtype=jnp.float32) * 0.05

    ref = jax.block_until_ready(_reference(alpha, X, y, w1, b1, w2))

    # f32 streaming path (block_f=256 so the F grid axis has multiple steps).
    penalty = jax.block_until_ready(
        gradient_penalty(alpha, X, y, w1, b1, w2,
                         block_f=256, nsplit=2, stream_dtype=jnp.float32))
    assert jnp.allclose(penalty, ref, atol=1e-3, rtol=1e-3), (penalty, ref)

    # bf16 streaming path (bandwidth-optimized; f32 accumulation; looser tol).
    penalty_bf16 = jax.block_until_ready(
        gradient_penalty(alpha, X, y, w1, b1, w2,
                         block_f=256, nsplit=2, stream_dtype=jnp.bfloat16))
    assert jnp.allclose(penalty_bf16, ref, atol=5e-2, rtol=5e-2), (penalty_bf16, ref)

    print("KERNEL_OK")
</pallas_src>

<mosaic_0001>
module attributes {stable_mosaic.version = 11 : i64} {
  func.func @_gp_accum_kernel(%arg0: i32, %arg1: i32, %arg2: memref<2x256xf32, #tpu.memory_space<vmem>>, %arg3: memref<2x256xf32, #tpu.memory_space<vmem>>, %arg4: memref<2x256xf32, #tpu.memory_space<vmem>>, %arg5: memref<256x32xf32, #tpu.memory_space<vmem>>, %arg6: memref<1x2x32xf32, #tpu.memory_space<vmem>>, %arg7: memref<1x32x32xf32, #tpu.memory_space<vmem>>) attributes {dimension_semantics = [#tpu.dimension_semantics<parallel>, #tpu.dimension_semantics<arbitrary>], iteration_bounds = array<i64: 2, 2>, scalar_prefetch = 0 : i64, scratch_operands = 0 : i64, tpu.core_type = #tpu.core_type<tc>, window_params = [{transform_indices = @transform_0, window_bounds = array<i64: 2, 256>}, {transform_indices = @transform_1, window_bounds = array<i64: 2, 256>}, {transform_indices = @transform_2, window_bounds = array<i64: 2, 256>}, {transform_indices = @transform_3, window_bounds = array<i64: 256, 32>}, {transform_indices = @transform_4, window_bounds = array<i64: 1, 2, 32>}, {transform_indices = @transform_5, window_bounds = array<i64: 1, 32, 32>}]} {
    %c0_i32 = arith.constant 0 : i32
    %0 = arith.cmpi eq, %arg1, %c0_i32 : i32
    %1 = arith.extui %0 : i1 to i32
    %c0_i32_0 = arith.constant 0 : i32
    %2 = arith.cmpi ne, %1, %c0_i32_0 : i32
    scf.if %2 {
      %cst_22 = arith.constant 0.000000e+00 : f32
      %26 = vector.broadcast %cst_22 : f32 to vector<1x2x32xf32>
      %c0_23 = arith.constant 0 : index
      %c0_24 = arith.constant 0 : index
      %c0_25 = arith.constant 0 : index
      %27 = vector.load %arg6[%c0_23, %c0_24, %c0_25] : memref<1x2x32xf32, #tpu.memory_space<vmem>>, vector<1x2x32xf32>
      tpu.vector_store %arg6[%c0_23, %c0_24, %c0_25], %26 {strides = array<i32>} : memref<1x2x32xf32, #tpu.memory_space<vmem>>, vector<1x2x32xf32>,
      %cst_26 = arith.constant 0.000000e+00 : f32
      %28 = vector.broadcast %cst_26 : f32 to vector<1x32x32xf32>
      %c0_27 = arith.constant 0 : index
      %c0_28 = arith.constant 0 : index
      %c0_29 = arith.constant 0 : index
      %29 = vector.load %arg7[%c0_27, %c0_28, %c0_29] : memref<1x32x32xf32, #tpu.memory_space<vmem>>, vector<1x32x32xf32>
      tpu.vector_store %arg7[%c0_27, %c0_28, %c0_29], %28 {strides = array<i32>} : memref<1x32x32xf32, #tpu.memory_space<vmem>>, vector<1x32x32xf32>,
    } else {
    }
    %c0 = arith.constant 0 : index
    %c0_1 = arith.constant 0 : index
    %3 = vector.load %arg2[%c0, %c0_1] : memref<2x256xf32, #tpu.memory_space<vmem>>, vector<2x256xf32>
    %c0_2 = arith.constant 0 : index
    %c0_3 = arith.constant 0 : index
    %4 = vector.load %arg3[%c0_2, %c0_3] : memref<2x256xf32, #tpu.memory_space<vmem>>, vector<2x256xf32>
    %c0_4 = arith.constant 0 : index
    %c0_5 = arith.constant 0 : index
    %5 = vector.load %arg4[%c0_4, %c0_5] : memref<2x256xf32, #tpu.memory_space<vmem>>, vector<2x256xf32>
    %6 = arith.mulf %3, %4 : vector<2x256xf32>
    %cst = arith.constant 1.000000e+00 : f32
    %7 = vector.broadcast %cst : f32 to vector<2x256xf32>
    %8 = arith.subf %7, %3 : vector<2x256xf32>
    %9 = arith.mulf %8, %5 : vector<2x256xf32>
    %10 = arith.addf %6, %9 : vector<2x256xf32>
    %c0_6 = arith.constant 0 : index
    %c0_7 = arith.constant 0 : index
    %11 = vector.load %arg5[%c0_6, %c0_7] : memref<256x32xf32, #tpu.memory_space<vmem>>, vector<256x32xf32>
    %c0_8 = arith.constant 0 : index
    %c0_9 = arith.constant 0 : index
    %c0_10 = arith.constant 0 : index
    %12 = vector.load %arg6[%c0_8, %c0_9, %c0_10] : memref<1x2x32xf32, #tpu.memory_space<vmem>>, vector<1x2x32xf32>
    %13 = vector.shape_cast %12 : vector<1x2x32xf32> to vector<2x32xf32>
    %cst_11 = arith.constant dense<0.000000e+00> : vector<2x32xf32>
    %14 = tpu.matmul %10, %11, %cst_11 {dimension_numbers = #tpu.dot_dimension_numbers<[1], [0], [0], [1], [0, 0, 1, 1], [], []>} : vector<2x256xf32>, vector<256x32xf32>, vector<2x32xf32> -> vector<2x32xf32>
    %15 = arith.addf %13, %14 : vector<2x32xf32>
    %c0_12 = arith.constant 0 : index
    %c0_13 = arith.constant 0 : index
    %c0_14 = arith.constant 0 : index
    %16 = vector.load %arg6[%c0_12, %c0_13, %c0_14] : memref<1x2x32xf32, #tpu.memory_space<vmem>>, vector<1x2x32xf32>
    %17 = vector.shape_cast %16 : vector<1x2x32xf32> to vector<2x32xf32>
    %18 = vector.shape_cast %15 : vector<2x32xf32> to vector<1x2x32xf32>
    tpu.vector_store %arg6[%c0_12, %c0_13, %c0_14], %18 {strides = array<i32>} : memref<1x2x32xf32, #tpu.memory_space<vmem>>, vector<1x2x32xf32>,
    %c0_15 = arith.constant 0 : index
    %c0_16 = arith.constant 0 : index
    %c0_17 = arith.constant 0 : index
    %19 = vector.load %arg7[%c0_15, %c0_16, %c0_17] : memref<1x32x32xf32, #tpu.memory_space<vmem>>, vector<1x32x32xf32>
    %20 = vector.shape_cast %19 : vector<1x32x32xf32> to vector<32x32xf32>
    %cst_18 = arith.constant dense<0.000000e+00> : vector<32x32xf32>
    %21 = tpu.matmul %11, %11, %cst_18 {dimension_numbers = #tpu.dot_dimension_numbers<[0], [0], [1], [1], [0, 1, 1, 1], [], []>} : vector<256x32xf32>, vector<256x32xf32>, vector<32x32xf32> -> vector<32x32xf32>
    %22 = arith.addf %20, %21 : vector<32x32xf32>
    %c0_19 = arith.constant 0 : index
    %c0_20 = arith.constant 0 : index
    %c0_21 = arith.constant 0 : index
    %23 = vector.load %arg7[%c0_19, %c0_20, %c0_21] : memref<1x32x32xf32, #tpu.memory_space<vmem>>, vector<1x32x32xf32>
    %24 = vector.shape_cast %23 : vector<1x32x32xf32> to vector<32x32xf32>
    %25 = vector.shape_cast %22 : vector<32x32xf32> to vector<1x32x32xf32>
    tpu.vector_store %arg7[%c0_19, %c0_20, %c0_21], %25 {strides = array<i32>} : memref<1x32x32xf32, #tpu.memory_space<vmem>>, vector<1x32x32xf32>,
    return
  }
  func.func @transform_0(%arg0: i32, %arg1: i32) -> (i32, i32) {
    %c2_i32 = arith.constant 2 : i32
    %0 = arith.muli %arg0, %c2_i32 : i32
    %1 = arith.addi %0, %arg1 : i32
    %c0_i32 = arith.constant 0 : i32
    %c0_i32_0 = arith.constant 0 : i32
    return %c0_i32, %1 : i32, i32
  }
  func.func @transform_1(%arg0: i32, %arg1: i32) -> (i32, i32) {
    %c2_i32 = arith.constant 2 : i32
    %0 = arith.muli %arg0, %c2_i32 : i32
    %1 = arith.addi %0, %arg1 : i32
    %c0_i32 = arith.constant 0 : i32
    %c0_i32_0 = arith.constant 0 : i32
    return %c0_i32, %1 : i32, i32
  }
  func.func @transform_2(%arg0: i32, %arg1: i32) -> (i32, i32) {
    %c2_i32 = arith.constant 2 : i32
    %0 = arith.muli %arg0, %c2_i32 : i32
    %1 = arith.addi %0, %arg1 : i32
    %c0_i32 = arith.constant 0 : i32
    %c0_i32_0 = arith.constant 0 : i32
    return %c0_i32, %1 : i32, i32
  }
  func.func @transform_3(%arg0: i32, %arg1: i32) -> (i32, i32) {
    %c2_i32 = arith.constant 2 : i32
    %0 = arith.muli %arg0, %c2_i32 : i32
    %1 = arith.addi %0, %arg1 : i32
    %c0_i32 = arith.constant 0 : i32
    %c0_i32_0 = arith.constant 0 : i32
    return %1, %c0_i32 : i32, i32
  }
  func.func @transform_4(%arg0: i32, %arg1: i32) -> (i32, i32, i32) {
    %c0_i32 = arith.constant 0 : i32
    %c0_i32_0 = arith.constant 0 : i32
    %c0_i32_1 = arith.constant 0 : i32
    return %arg0, %c0_i32, %c0_i32_0 : i32, i32, i32
  }
  func.func @transform_5(%arg0: i32, %arg1: i32) -> (i32, i32, i32) {
    %c0_i32 = arith.constant 0 : i32
    %c0_i32_0 = arith.constant 0 : i32
    %c0_i32_1 = arith.constant 0 : i32
    return %arg0, %c0_i32, %c0_i32_0 : i32, i32, i32
  }
}

</mosaic_0001>

<llo_original>
// kernel: tpu_custom_call.1
$region0: #{tpu_custom_call.1}
  #allocation0 [shape = 'u32[]', space=smem, size = 0x4, offset = 0x4, fixed_abs, tag = 'smem constant byte address 0x4 - core index']
  #allocation1 [shape = 'u32[144,128]{1,0:T(1,128)}', space=vmem, size = 0x12000, scoped, tag = 'internal scratch']
  %s0 = inlined_call_operand.vmem [shape: f32[2,1024], index: 0, kind: input, shape index: {}]
  %s1 = inlined_call_operand.vmem [shape: f32[2,1024], index: 1, kind: input, shape index: {}]
  %s2 = inlined_call_operand.vmem [shape: f32[2,1024], index: 2, kind: input, shape index: {}]
  %s3 = inlined_call_operand.vmem [shape: f32[1024,32], index: 3, kind: input, shape index: {}]
  %s4 = inlined_call_operand.hbm [shape: f32[2,2,32], index: 4, kind: output, shape index: {0}]
  %s5 = inlined_call_operand.hbm [shape: f32[2,32,32], index: 5, kind: output, shape index: {1}]
  %6 = xla_tuple %s4, %s5
  %s7 = sld [smem:[#allocation0]]
  $region61: #{tpu_custom_call.1} parent=0
    _
  %s9 = ssub.s32 1, %s7
  %s10 = scalar_select 0, %s9, %s7
  $region1: #{tpu_custom_call.1} parent=0
    #allocation2 [shape = 'u8[2048]{0}', space=vmem, size = 0x800, scoped, tag = 'output window, operand 0']
    #allocation3 [shape = 's32[2]{0}', space=sflag, size = 0x8, scoped, tag = 'scoped memory for tpu_custom_call.1']
    #allocation4 [shape = 'u8[32768]{0}', space=vmem, size = 0x8000, scoped, tag = 'output window, operand 1']
    #allocation5 [shape = 's32[2]{0}', space=sflag, size = 0x8, scoped, tag = 'scoped memory for tpu_custom_call.1']
    %11 = vsyncpa [#allocation3], 0
    %s12 = scalar_lea.sflag [#allocation3], 1
    %13 = vsyncpa %s12, 0
    %14 = vsyncpa [#allocation5], 0
    %s15 = scalar_lea.sflag [#allocation5], 1
    %16 = vsyncpa %s15, 0
    loop: start=0, step=1, limit=6
    $region2: #{tpu_custom_call.1} parent=1 // loop_pre_header
      _
    $region3: #{tpu_custom_call.1} parent=1 // loop_header
      %s18 = sphi 0, %s22
      %p19 = scmp.ge.s32.totalorder %s18, 6
      %s25 = sphi 0, %s37
      %s26 = sphi 0, %s33
      %s27 = sphi 0, %s25
      %s28 = sphi 0, %s26
      %s29 = sphi 0, %s27
      %s30 = sphi 0, %s28
      %s44 = sphi 0, %s46
      %s47 = sphi 0, %s44
      %s48 = sphi 0, %s47
      %s64 = sphi 0, %s48
      %s74 = sphi 0, %s76
      %s77 = sphi 0, %s74
      %s78 = sphi 0, %s77
      %s94 = sphi 0, %s78
      %s104 = sphi 0, %s106
      %s107 = sphi 0, %s104
      %s108 = sphi 0, %s107
      %s124 = sphi 0, %s108
      %s134 = sphi 0, %s136
      %s137 = sphi 0, %s134
      %s138 = sphi 0, %s137
      %s154 = sphi 0, %s138
      %s160 = sphi 0, %s162
      %s163 = sphi 0, %s160
      %s164 = sphi 0, %s163
      %s180 = sphi 0, %s164
      %s186 = sphi 0, %s188
      %s189 = sphi 0, %s186
      %s190 = sphi 0, %s189
      %s206 = sphi 0, %s190
    $region4: #{tpu_custom_call.1} parent=1 // loop_header_branch
      %21 = sbr.rel (%p19) target = $region8
    $region5: #{tpu_custom_call.1} parent=1 // loop_body
      %s23 = ssub.s32 %s18, 1
      %s24 = ssub.s32 %s18, 2
      %s31 = sadd.s32 1, %s26
      %p32 = scmp.ge.s32.totalorder %s31, 2
      %s33 = scalar_select %p32, 0, %s31
      %s34 = sadd.s32 1, %s25
      %s35 = scalar_select %p32, %s34, %s25
      %p36 = scmp.ge.s32.totalorder %s35, 2
      %s37 = scalar_select %p36, 0, %s35
      %s38 = smul.u32 %s25, 2
      %s39 = sadd.s32 %s38, %s26
      %s40 = smul.u32 %s37, 2
      %s41 = sadd.s32 %s40, %s33
      %s42 = ssub.s32 %s39, %s41
      %p43 = scmp.eq.s32.totalorder %s42, 0
      %s45 = sadd.s32 %s44, 1
      %s46 = scalar_select %p43, %s44, %s45
      %p49 = pneg %p43
      %p50 = scmp.eq.s32.totalorder %s18, 3
      %p51 = por %p49, %p50
      %p52 = scmp.ne.s32.totalorder %s44, %s47
      %p53 = scmp.eq.s32.totalorder %s18, 0
      %p54 = por %p52, %p53
      %p55 = scmp.ne.s32.totalorder %s44, %s47
      %p56 = scmp.eq.s32.totalorder %s23, 3
      %p57 = por %p55, %p56
      %p58 = scmp.ne.s32.totalorder %s47, %s48
      %p59 = scmp.eq.s32.totalorder %s23, 0
      %p60 = por %p58, %p59
      %p61 = scmp.ne.s32.totalorder %s47, %s48
      %p62 = scmp.eq.s32.totalorder %s24, 3
      %p63 = por %p61, %p62
      %p65 = scmp.ne.s32.totalorder %s48, %s64
      %p66 = scmp.eq.s32.totalorder %s24, 0
      %p67 = por %p65, %p66
      %s68 = smul.u32 %s25, 2
      %s69 = sadd.s32 %s68, %s26
      %s70 = smul.u32 %s37, 2
      %s71 = sadd.s32 %s70, %s33
      %s72 = ssub.s32 %s69, %s71
      %p73 = scmp.eq.s32.totalorder %s72, 0
      %s75 = sadd.s32 %s74, 1
      %s76 = scalar_select %p73, %s74, %s75
      %p79 = pneg %p73
      %p80 = scmp.eq.s32.totalorder %s18, 3
      %p81 = por %p79, %p80
      %p82 = scmp.ne.s32.totalorder %s74, %s77
      %p83 = scmp.eq.s32.totalorder %s18, 0
      %p84 = por %p82, %p83
      %p85 = scmp.ne.s32.totalorder %s74, %s77
      %p86 = scmp.eq.s32.totalorder %s23, 3
      %p87 = por %p85, %p86
      %p88 = scmp.ne.s32.totalorder %s77, %s78
      %p89 = scmp.eq.s32.totalorder %s23, 0
      %p90 = por %p88, %p89
      %p91 = scmp.ne.s32.totalorder %s77, %s78
      %p92 = scmp.eq.s32.totalorder %s24, 3
      %p93 = por %p91, %p92
      %p95 = scmp.ne.s32.totalorder %s78, %s94
      %p96 = scmp.eq.s32.totalorder %s24, 0
      %p97 = por %p95, %p96
      %s98 = smul.u32 %s25, 2
      %s99 = sadd.s32 %s98, %s26
      %s100 = smul.u32 %s37, 2
      %s101 = sadd.s32 %s100, %s33
      %s102 = ssub.s32 %s99, %s101
      %p103 = scmp.eq.s32.totalorder %s102, 0
      %s105 = sadd.s32 %s104, 1
      %s106 = scalar_select %p103, %s104, %s105
      %p109 = pneg %p103
      %p110 = scmp.eq.s32.totalorder %s18, 3
      %p111 = por %p109, %p110
      %p112 = scmp.ne.s32.totalorder %s104, %s107
      %p113 = scmp.eq.s32.totalorder %s18, 0
      %p114 = por %p112, %p113
      %p115 = scmp.ne.s32.totalorder %s104, %s107
      %p116 = scmp.eq.s32.totalorder %s23, 3
      %p117 = por %p115, %p116
      %p118 = scmp.ne.s32.totalorder %s107, %s108
      %p119 = scmp.eq.s32.totalorder %s23, 0
      %p120 = por %p118, %p119
      %p121 = scmp.ne.s32.totalorder %s107, %s108
      %p122 = scmp.eq.s32.totalorder %s24, 3
      %p123 = por %p121, %p122
      %p125 = scmp.ne.s32.totalorder %s108, %s124
      %p126 = scmp.eq.s32.totalorder %s24, 0
      %p127 = por %p125, %p126
      %s128 = smul.u32 %s25, 2
      %s129 = sadd.s32 %s128, %s26
      %s130 = smul.u32 %s37, 2
      %s131 = sadd.s32 %s130, %s33
      %s132 = ssub.s32 %s129, %s131
      %p133 = scmp.eq.s32.totalorder %s132, 0
      %s135 = sadd.s32 %s134, 1
      %s136 = scalar_select %p133, %s134, %s135
      %p139 = pneg %p133
      %p140 = scmp.eq.s32.totalorder %s18, 3
      %p141 = por %p139, %p140
      %p142 = scmp.ne.s32.totalorder %s134, %s137
      %p143 = scmp.eq.s32.totalorder %s18, 0
      %p144 = por %p142, %p143
      %p145 = scmp.ne.s32.totalorder %s134, %s137
      %p146 = scmp.eq.s32.totalorder %s23, 3
      %p147 = por %p145, %p146
      %p148 = scmp.ne.s32.totalorder %s137, %s138
      %p149 = scmp.eq.s32.totalorder %s23, 0
      %p150 = por %p148, %p149
      %p151 = scmp.ne.s32.totalorder %s137, %s138
      %p152 = scmp.eq.s32.totalorder %s24, 3
      %p153 = por %p151, %p152
      %p155 = scmp.ne.s32.totalorder %s138, %s154
      %p156 = scmp.eq.s32.totalorder %s24, 0
      %p157 = por %p155, %p156
      %s158 = ssub.s32 %s25, %s37
      %p159 = scmp.eq.s32.totalorder %s158, 0
      %s161 = sadd.s32 %s160, 1
      %s162 = scalar_select %p159, %s160, %s161
      %p165 = pneg %p159
      %p166 = scmp.eq.s32.totalorder %s18, 3
      %p167 = por %p165, %p166
      %p168 = scmp.ne.s32.totalorder %s160, %s163
      %p169 = scmp.eq.s32.totalorder %s18, 0
      %p170 = por %p168, %p169
      %p171 = scmp.ne.s32.totalorder %s160, %s163
      %p172 = scmp.eq.s32.totalorder %s23, 3
      %p173 = por %p171, %p172
      %p174 = scmp.ne.s32.totalorder %s163, %s164
      %p175 = scmp.eq.s32.totalorder %s23, 0
      %p176 = por %p174, %p175
      %p177 = scmp.ne.s32.totalorder %s163, %s164
      %p178 = scmp.eq.s32.totalorder %s24, 3
      %p179 = por %p177, %p178
      %p181 = scmp.ne.s32.totalorder %s164, %s180
      %p182 = scmp.eq.s32.totalorder %s24, 0
      %p183 = por %p181, %p182
      %s184 = ssub.s32 %s25, %s37
      %p185 = scmp.eq.s32.totalorder %s184, 0
      %s187 = sadd.s32 %s186, 1
      %s188 = scalar_select %p185, %s186, %s187
      %p191 = pneg %p185
      %p192 = scmp.eq.s32.totalorder %s18, 3
      %p193 = por %p191, %p192
      %p194 = scmp.ne.s32.totalorder %s186, %s189
      %p195 = scmp.eq.s32.totalorder %s18, 0
      %p196 = por %p194, %p195
      %p197 = scmp.ne.s32.totalorder %s186, %s189
      %p198 = scmp.eq.s32.totalorder %s23, 3
      %p199 = por %p197, %p198
      %p200 = scmp.ne.s32.totalorder %s189, %s190
      %p201 = scmp.eq.s32.totalorder %s23, 0
      %p202 = por %p200, %p201
      %p203 = scmp.ne.s32.totalorder %s189, %s190
      %p204 = scmp.eq.s32.totalorder %s24, 3
      %p205 = por %p203, %p204
      %p207 = scmp.ne.s32.totalorder %s190, %s206
      %p208 = scmp.eq.s32.totalorder %s24, 0
      %p209 = por %p207, %p208
      %p210 = scmp.le.s32.totalorder 1, %s18
      %p211 = scmp.lt.s32.totalorder %s18, 5
      %p212 = pnand %p210, %p211
      %p213 = pneg %p212
      // Predicated region
      $region9: #{tpu_custom_call.1} parent=5 // pred_check
        _
      $region10: #{tpu_custom_call.1} parent=5 // pred_check_branch
        %215 = sbr.rel (%p212) target = $region12
      $region11: #{tpu_custom_call.1} parent=5 // pred_region
        %s216 = ssub.s32 %s18, 1
      $region12: #{tpu_custom_call.1} parent=5 // pred_fallthru
        _
      %p217 = scmp.lt.s32.totalorder %s18, 4
      // Predicated region
      $region13: #{tpu_custom_call.1} parent=5 // pred_check
        %p218 = pneg %p217
      $region14: #{tpu_custom_call.1} parent=5 // pred_check_branch
        %220 = sbr.rel (%p218) target = $region16
      $region15: #{tpu_custom_call.1} parent=5 // pred_region
        // Predicated region
        $region17: #{tpu_custom_call.1} parent=15 // pred_check
          %p221 = pneg %p54
        $region18: #{tpu_custom_call.1} parent=15 // pred_check_branch
          %223 = sbr.rel (%p221) target = $region20
        $region19: #{tpu_custom_call.1} parent=15 // pred_region
          %s224 = smul.u32 %s25, 2
          %s225 = sadd.s32 %s224, %s26
          %s226 = smul.u32 2, %s225
          %p227 = scmp.lt.s32.totalorder %s226, 7
          %s228 = scalar_select %p227, %s226, 7
          %s229 = smul.addr %s228, 2
          %s230 = scalar_lea.vmem %s0, %s229
          %s231 = smul.u32 %s25, 2
          %s232 = sadd.s32 %s231, %s26
          %s233 = smul.u32 2, %s232
        $region20: #{tpu_custom_call.1} parent=15 // pred_fallthru
          _
        // Predicated region
        $region21: #{tpu_custom_call.1} parent=15 // pred_check
          %p234 = pneg %p84
        $region22: #{tpu_custom_call.1} parent=15 // pred_check_branch
          %236 = sbr.rel (%p234) target = $region24
        $region23: #{tpu_custom_call.1} parent=15 // pred_region
          %s237 = smul.u32 %s25, 2
          %s238 = sadd.s32 %s237, %s26
          %s239 = smul.u32 2, %s238
          %p240 = scmp.lt.s32.totalorder %s239, 7
          %s241 = scalar_select %p240, %s239, 7
          %s242 = smul.addr %s241, 2
          %s243 = scalar_lea.vmem %s1, %s242
          %s244 = smul.u32 %s25, 2
          %s245 = sadd.s32 %s244, %s26
          %s246 = smul.u32 2, %s245
        $region24: #{tpu_custom_call.1} parent=15 // pred_fallthru
          _
        // Predicated region
        $region25: #{tpu_custom_call.1} parent=15 // pred_check
          %p247 = pneg %p114
        $region26: #{tpu_custom_call.1} parent=15 // pred_check_branch
          %249 = sbr.rel (%p247) target = $region28
        $region27: #{tpu_custom_call.1} parent=15 // pred_region
          %s250 = smul.u32 %s25, 2
          %s251 = sadd.s32 %s250, %s26
          %s252 = smul.u32 2, %s251
          %p253 = scmp.lt.s32.totalorder %s252, 7
          %s254 = scalar_select %p253, %s252, 7
          %s255 = smul.addr %s254, 2
          %s256 = scalar_lea.vmem %s2, %s255
          %s257 = smul.u32 %s25, 2
          %s258 = sadd.s32 %s257, %s26
          %s259 = smul.u32 2, %s258
        $region28: #{tpu_custom_call.1} parent=15 // pred_fallthru
          _
        // Predicated region
        $region29: #{tpu_custom_call.1} parent=15 // pred_check
          %p260 = pneg %p144
        $region30: #{tpu_custom_call.1} parent=15 // pred_check_branch
          %262 = sbr.rel (%p260) target = $region32
        $region31: #{tpu_custom_call.1} parent=15 // pred_region
          %s263 = smul.u32 %s25, 2
          %s264 = sadd.s32 %s263, %s26
          %s265 = smul.u32 32, %s264
          %p266 = scmp.lt.s32.totalorder %s265, 127
          %s267 = scalar_select %p266, %s265, 127
          %s268 = smul.addr %s267, 8
          %s269 = scalar_lea.vmem %s3, %s268
          %s270 = smul.u32 %s25, 2
          %s271 = sadd.s32 %s270, %s26
          %s272 = smul.u32 32, %s271
        $region32: #{tpu_custom_call.1} parent=15 // pred_fallthru
          _
      $region16: #{tpu_custom_call.1} parent=5 // pred_fallthru
        _
      %p273 = scmp.le.s32.totalorder 1, %s18
      %p274 = scmp.lt.s32.totalorder %s18, 5
      %p275 = pnand %p273, %p274
      %p276 = pneg %p275
      // Predicated region
      $region33: #{tpu_custom_call.1} parent=5 // pred_check
        _
      $region34: #{tpu_custom_call.1} parent=5 // pred_check_branch
        %278 = sbr.rel (%p275) target = $region36
      $region35: #{tpu_custom_call.1} parent=5 // pred_region
        %s279 = ssub.s32 %s18, 1
        %s280 = smul.u32 %s27, 2
        %s281 = sadd.s32 %s280, %s28
        %s282 = smul.u32 2, %s281
        %p283 = scmp.lt.s32.totalorder %s282, 7
        %s284 = scalar_select %p283, %s282, 7
        %s285 = smul.addr %s284, 2
        %s286 = scalar_lea.vmem %s0, %s285
        %p287 = pneg %p60
        %p288 = pneg %p57
        %s289 = smul.u32 %s27, 2
        %s290 = sadd.s32 %s289, %s28
        %s291 = smul.u32 2, %s290
        %p292 = scmp.lt.s32.totalorder %s291, 7
        %s293 = scalar_select %p292, %s291, 7
        %s294 = smul.addr %s293, 2
        %s295 = scalar_lea.vmem %s1, %s294
        %p296 = pneg %p90
        %p297 = pneg %p87
        %s298 = smul.u32 %s27, 2
        %s299 = sadd.s32 %s298, %s28
        %s300 = smul.u32 2, %s299
        %p301 = scmp.lt.s32.totalorder %s300, 7
        %s302 = scalar_select %p301, %s300, 7
        %s303 = smul.addr %s302, 2
        %s304 = scalar_lea.vmem %s2, %s303
        %p305 = pneg %p120
        %p306 = pneg %p117
        %s307 = smul.u32 %s27, 2
        %s308 = sadd.s32 %s307, %s28
        %s309 = smul.u32 32, %s308
        %p310 = scmp.lt.s32.totalorder %s309, 127
        %s311 = scalar_select %p310, %s309, 127
        %s312 = smul.addr %s311, 8
        %s313 = scalar_lea.vmem %s3, %s312
        %p314 = pneg %p150
        %p315 = pneg %p147
        %p316 = pneg %p176
        %p317 = pneg %p173
        %s318 = sand.u32 %s163, 1
        %s319 = scalar_lea.sflag [#allocation3], %s318
        %s320 = sand.u32 %s163, 1
        %s321 = smul.addr %s320, 2
        %s322 = scalar_lea.vmem [#allocation2], %s321
        %p323 = pneg %p202
        %p324 = pneg %p199
        %s325 = sand.u32 %s189, 1
        %s326 = scalar_lea.sflag [#allocation5], %s325
        %s327 = sand.u32 %s189, 1
        %s328 = smul.addr %s327, 32
        %s329 = scalar_lea.vmem [#allocation4], %s328
        %s330 = smul.u32 %s27, 2
        %s331 = sadd.s32 %s330, %s28
        %s332 = smul.u32 2, %s331
        %p333 = scmp.lt.s32.totalorder %s332, 7
        %s334 = scalar_select %p333, %s332, 7
        %s335 = smul.addr %s334, 2
        %s336 = scalar_lea.vmem %s0, %s335
        %s337 = smul.u32 %s27, 2
        %s338 = sadd.s32 %s337, %s28
        %s339 = smul.u32 2, %s338
        %s340 = smul.u32 %s27, 2
        %s341 = sadd.s32 %s340, %s28
        %s342 = smul.u32 2, %s341
        %p343 = scmp.lt.s32.totalorder %s342, 7
        %s344 = scalar_select %p343, %s342, 7
        %s345 = smul.addr %s344, 2
        %s346 = scalar_lea.vmem %s1, %s345
        %s347 = smul.u32 %s27, 2
        %s348 = sadd.s32 %s347, %s28
        %s349 = smul.u32 2, %s348
        %s350 = smul.u32 %s27, 2
        %s351 = sadd.s32 %s350, %s28
        %s352 = smul.u32 2, %s351
        %p353 = scmp.lt.s32.totalorder %s352, 7
        %s354 = scalar_select %p353, %s352, 7
        %s355 = smul.addr %s354, 2
        %s356 = scalar_lea.vmem %s2, %s355
        %s357 = smul.u32 %s27, 2
        %s358 = sadd.s32 %s357, %s28
        %s359 = smul.u32 2, %s358
        %s360 = smul.u32 %s27, 2
        %s361 = sadd.s32 %s360, %s28
        %s362 = smul.u32 32, %s361
        %p363 = scmp.lt.s32.totalorder %s362, 127
        %s364 = scalar_select %p363, %s362, 127
        %s365 = smul.addr %s364, 8
        %s366 = scalar_lea.vmem %s3, %s365
        %s367 = smul.u32 %s27, 2
        %s368 = sadd.s32 %s367, %s28
        %s369 = smul.u32 32, %s368
        %p370 = scmp.eq.s32.totalorder %s28, 0
        // Predicated region
        $region37: #{tpu_custom_call.1} parent=35 // pred_check
          %p371 = pneg %p370
        $region38: #{tpu_custom_call.1} parent=35 // pred_check_branch
          %373 = sbr.rel (%p371) target = $region40
        $region39: #{tpu_custom_call.1} parent=35 // pred_region
          %vm374 = vcmask 254976
          %375 = vst.msk [vmem:[%s322] sm:$0x3] %vm374, 0.0
          %vm376 = vcmask 261120
          %377 = vst.msk [vmem:[%s329] sm:$0xff] %vm376, 0.0
          %378 = vst.msk [vmem:[%s329 + $0x8] sm:$0xff] %vm376, 0.0
          %379 = vst.msk [vmem:[%s329 + $0x10] sm:$0xff] %vm376, 0.0
          %380 = vst.msk [vmem:[%s329 + $0x18] sm:$0xff] %vm376, 0.0
        $region40: #{tpu_custom_call.1} parent=35 // pred_fallthru
          _
        %v381 = vld [vmem:[%s336] sm:$0xf]
        %v382 = vld [vmem:[%s346] sm:$0xf]
        %v383 = vld [vmem:[%s356] sm:$0xf]
        %v384 = vmul.f32 %v381, %v382
        %v385 = vsub.f32 1.0, %v381
        %v386 = vmul.f32 %v385, %v383
        %v387 = vadd.f32 %v384, %v386
        %v388 = vld [vmem:[%s366] sm:$0xff]
        %v389 = vld [vmem:[%s366 + $0x8] sm:$0xff]
        %v390 = vld [vmem:[%s366 + $0x10] sm:$0xff]
        %v391 = vld [vmem:[%s366 + $0x18] sm:$0xff]
        %v392 = vld [vmem:[%s366 + $0x20] sm:$0xff]
        %v393 = vld [vmem:[%s366 + $0x28] sm:$0xff]
        %v394 = vld [vmem:[%s366 + $0x30] sm:$0xff]
        %v395 = vld [vmem:[%s366 + $0x38] sm:$0xff]
        %v396 = vld [vmem:[%s366 + $0x40] sm:$0xff]
        %v397 = vld [vmem:[%s366 + $0x48] sm:$0xff]
        %v398 = vld [vmem:[%s366 + $0x50] sm:$0xff]
        %v399 = vld [vmem:[%s366 + $0x58] sm:$0xff]
        %v400 = vld [vmem:[%s366 + $0x60] sm:$0xff]
        %v401 = vld [vmem:[%s366 + $0x68] sm:$0xff]
        %v402 = vld [vmem:[%s366 + $0x70] sm:$0xff]
        %v403 = vld [vmem:[%s366 + $0x78] sm:$0xff]
        %v404 = vld [vmem:[%s366 + $0x80] sm:$0xff]
        %v405 = vld [vmem:[%s366 + $0x88] sm:$0xff]
        %v406 = vld [vmem:[%s366 + $0x90] sm:$0xff]
        %v407 = vld [vmem:[%s366 + $0x98] sm:$0xff]
        %v408 = vld [vmem:[%s366 + $0xa0] sm:$0xff]
        %v409 = vld [vmem:[%s366 + $0xa8] sm:$0xff]
        %v410 = vld [vmem:[%s366 + $0xb0] sm:$0xff]
        %v411 = vld [vmem:[%s366 + $0xb8] sm:$0xff]
        %v412 = vld [vmem:[%s366 + $0xc0] sm:$0xff]
        %v413 = vld [vmem:[%s366 + $0xc8] sm:$0xff]
        %v414 = vld [vmem:[%s366 + $0xd0] sm:$0xff]
        %v415 = vld [vmem:[%s366 + $0xd8] sm:$0xff]
        %v416 = vld [vmem:[%s366 + $0xe0] sm:$0xff]
        %v417 = vld [vmem:[%s366 + $0xe8] sm:$0xff]
        %v418 = vld [vmem:[%s366 + $0xf0] sm:$0xff]
        %v419 = vld [vmem:[%s366 + $0xf8] sm:$0xff]
        %v420 = vld [vmem:[%s322] sm:$0x3]
        %v423 = vunpack.c.l.s4 1983009808
        %v424 = vunpack.c.0.s8 %v423
        %v425 = vlaneseq
        %v426 = vshrl.u32 %v425, 7
        %v427 = vsub.s32 %v424, %v426
        %v428 = vrot.slane %v387, %v427
        %v429 = vcombine.high %v428, %v428
        %432 = vmatprep.subr.mxu0 0.0
        %433 = vmatpush1.msra.mxu0 %v403
        %434 = vmatprep.subr.mxu0 0.0
        %435 = vmatpush1.msra.mxu0 %v402
        %436 = vmatprep.subr.mxu0 0.0
        %437 = vmatpush1.msra.mxu0 %v401
        %438 = vmatprep.subr.mxu0 0.0
        %439 = vmatpush1.msra.mxu0 %v400
        %440 = vmatprep.subr.mxu0 0.0
        %441 = vmatpush1.msra.mxu0 %v399
        %442 = vmatprep.subr.mxu0 0.0
        %443 = vmatpush1.msra.mxu0 %v398
        %444 = vmatprep.subr.mxu0 0.0
        %445 = vmatpush1.msra.mxu0 %v397
        %446 = vmatprep.subr.mxu0 0.0
        %447 = vmatpush1.msra.mxu0 %v396
        %448 = vmatprep.subr.mxu0 0.0
        %449 = vmatpush1.msra.mxu0 %v395
        %450 = vmatprep.subr.mxu0 0.0
        %451 = vmatpush1.msra.mxu0 %v394
        %452 = vmatprep.subr.mxu0 0.0
        %453 = vmatpush1.msra.mxu0 %v393
        %454 = vmatprep.subr.mxu0 0.0
        %455 = vmatpush1.msra.mxu0 %v392
        %456 = vmatprep.subr.mxu0 0.0
        %457 = vmatpush1.msra.mxu0 %v391
        %458 = vmatprep.subr.mxu0 0.0
        %459 = vmatpush1.msra.mxu0 %v390
        %460 = vmatprep.subr.mxu0 0.0
        %461 = vmatpush1.msra.mxu0 %v389
        %462 = vmatprep.subr.mxu0 0.0
        %463 = vmatpush1.msra.mxu0 %v388
        %464 = vmatprep.subr.mxu0 0.0
        %465 = vmatpush2.msra.mxu0 %v419
        %466 = vmatprep.subr.mxu0 0.0
        %467 = vmatpush2.msra.mxu0 %v418
        %468 = vmatprep.subr.mxu0 0.0
        %469 = vmatpush2.msra.mxu0 %v417
        %470 = vmatprep.subr.mxu0 0.0
        %471 = vmatpush2.msra.mxu0 %v416
        %472 = vmatprep.subr.mxu0 0.0
        %473 = vmatpush2.msra.mxu0 %v415
        %474 = vmatprep.subr.mxu0 0.0
        %475 = vmatpush2.msra.mxu0 %v414
        %476 = vmatprep.subr.mxu0 0.0
        %477 = vmatpush2.msra.mxu0 %v413
        %478 = vmatprep.subr.mxu0 0.0
        %479 = vmatpush2.msra.mxu0 %v412
        %480 = vmatprep.subr.mxu0 0.0
        %481 = vmatpush2.msra.mxu0 %v411
        %482 = vmatprep.subr.mxu0 0.0
        %483 = vmatpush2.msra.mxu0 %v410
        %484 = vmatprep.subr.mxu0 0.0
        %485 = vmatpush2.msra.mxu0 %v409
        %486 = vmatprep.subr.mxu0 0.0
        %487 = vmatpush2.msra.mxu0 %v408
        %488 = vmatprep.subr.mxu0 0.0
        %489 = vmatpush2.msra.mxu0 %v407
        %490 = vmatprep.subr.mxu0 0.0
        %491 = vmatpush2.msra.mxu0 %v406
        %492 = vmatprep.subr.mxu0 0.0
        %493 = vmatpush2.msra.mxu0 %v405
        %494 = vmatprep.subr.mxu0 0.0
        %495 = vmatpush2.msra.mxu0 %v404
        %496 = vmatprep.mubr.f32.mxu0 %v429
        %497 = vmatmul.mubr.f32.gmra.mxu0 %v428
        %v498 = vpop.f32.mrf.mxu0
        %v499 = vadd.f32 0.0, %v498
        %v500 = vpop.f32.mrf.mxu0
        %501 = vdwg.mxu0
        %v502 = vadd.f32 %v420, %v499
        %vm503 = vcmask 254976
        %504 = vst.msk [vmem:[%s322] sm:$0x3] %vm503, %v502
        %v505 = vld [vmem:[%s329] sm:$0xff]
        %v506 = vld [vmem:[%s329 + $0x8] sm:$0xff]
        %v507 = vld [vmem:[%s329 + $0x10] sm:$0xff]
        %v508 = vld [vmem:[%s329 + $0x18] sm:$0xff]
        %509 = vxpose.xlu0.b32.start [1/16] %v388, 128
        %510 = vxpose.xlu0.b32.cont [2/16] %v389, 128
        %511 = vxpose.xlu0.b32.cont [3/16] %v390, 128
        %512 = vxpose.xlu0.b32.cont [4/16] %v391, 128
        %513 = vxpose.xlu0.b32.cont [5/16] %v392, 128
        %514 = vxpose.xlu0.b32.cont [6/16] %v393, 128
        %515 = vxpose.xlu0.b32.cont [7/16] %v394, 128
        %516 = vxpose.xlu0.b32.cont [8/16] %v395, 128
        %517 = vxpose.xlu0.b32.cont [9/16] %v396, 128
        %518 = vxpose.xlu0.b32.cont [10/16] %v397, 128
        %519 = vxpose.xlu0.b32.cont [11/16] %v398, 128
        %520 = vxpose.xlu0.b32.cont [12/16] %v399, 128
        %521 = vxpose.xlu0.b32.cont [13/16] %v400, 128
        %522 = vxpose.xlu0.b32.cont [14/16] %v401, 128
        %523 = vxpose.xlu0.b32.cont [15/16] %v402, 128
        %524 = vxpose.xlu0.b32.end [16/16] %v403, 128
        %v525 = vpop.trf.xlu0
        %v526 = vpop.trf.xlu0
        %v527 = vpop.trf.xlu0
        %v528 = vpop.trf.xlu0
        %v529 = vpop.trf.xlu0
        %v530 = vpop.trf.xlu0
        %v531 = vpop.trf.xlu0
        %v532 = vpop.trf.xlu0
        %v533 = vpop.trf.xlu0
        %v534 = vpop.trf.xlu0
        %v535 = vpop.trf.xlu0
        %v536 = vpop.trf.xlu0
        %v537 = vpop.trf.xlu0
        %v538 = vpop.trf.xlu0
        %v539 = vpop.trf.xlu0
        %v540 = vpop.trf.xlu0
        %541 = vxpose.xlu0.b32.start [1/16] %v404, 128
        %542 = vxpose.xlu0.b32.cont [2/16] %v405, 128
        %543 = vxpose.xlu0.b32.cont [3/16] %v406, 128
        %544 = vxpose.xlu0.b32.cont [4/16] %v407, 128
        %545 = vxpose.xlu0.b32.cont [5/16] %v408, 128
        %546 = vxpose.xlu0.b32.cont [6/16] %v409, 128
        %547 = vxpose.xlu0.b32.cont [7/16] %v410, 128
        %548 = vxpose.xlu0.b32.cont [8/16] %v411, 128
        %549 = vxpose.xlu0.b32.cont [9/16] %v412, 128
        %550 = vxpose.xlu0.b32.cont [10/16] %v413, 128
        %551 = vxpose.xlu0.b32.cont [11/16] %v414, 128
        %552 = vxpose.xlu0.b32.cont [12/16] %v415, 128
        %553 = vxpose.xlu0.b32.cont [13/16] %v416, 128
        %554 = vxpose.xlu0.b32.cont [14/16] %v417, 128
        %555 = vxpose.xlu0.b32.cont [15/16] %v418, 128
        %556 = vxpose.xlu0.b32.end [16/16] %v419, 128
        %v557 = vpop.trf.xlu0
        %v558 = vpop.trf.xlu0
        %v559 = vpop.trf.xlu0
        %v560 = vpop.trf.xlu0
        %v561 = vpop.trf.xlu0
        %v562 = vpop.trf.xlu0
        %v563 = vpop.trf.xlu0
        %v564 = vpop.trf.xlu0
        %v565 = vpop.trf.xlu0
        %v566 = vpop.trf.xlu0
        %v567 = vpop.trf.xlu0
        %v568 = vpop.trf.xlu0
        %v569 = vpop.trf.xlu0
        %v570 = vpop.trf.xlu0
        %v571 = vpop.trf.xlu0
        %v572 = vpop.trf.xlu0
        %573 = vmatprep.subr.mxu0 0.0
        %574 = vmatpush1.msra.mxu0 %v403
        %575 = vmatprep.subr.mxu0 0.0
        %576 = vmatpush1.msra.mxu0 %v402
        %577 = vmatprep.subr.mxu0 0.0
        %578 = vmatpush1.msra.mxu0 %v401
        %579 = vmatprep.subr.mxu0 0.0
        %580 = vmatpush1.msra.mxu0 %v400
        %581 = vmatprep.subr.mxu0 0.0
        %582 = vmatpush1.msra.mxu0 %v399
        %583 = vmatprep.subr.mxu0 0.0
        %584 = vmatpush1.msra.mxu0 %v398
        %585 = vmatprep.subr.mxu0 0.0
        %586 = vmatpush1.msra.mxu0 %v397
        %587 = vmatprep.subr.mxu0 0.0
        %588 = vmatpush1.msra.mxu0 %v396
        %589 = vmatprep.subr.mxu0 0.0
        %590 = vmatpush1.msra.mxu0 %v395
        %591 = vmatprep.subr.mxu0 0.0
        %592 = vmatpush1.msra.mxu0 %v394
        %593 = vmatprep.subr.mxu0 0.0
        %594 = vmatpush1.msra.mxu0 %v393
        %595 = vmatprep.subr.mxu0 0.0
        %596 = vmatpush1.msra.mxu0 %v392
        %597 = vmatprep.subr.mxu0 0.0
        %598 = vmatpush1.msra.mxu0 %v391
        %599 = vmatprep.subr.mxu0 0.0
        %600 = vmatpush1.msra.mxu0 %v390
        %601 = vmatprep.subr.mxu0 0.0
        %602 = vmatpush1.msra.mxu0 %v389
        %603 = vmatprep.subr.mxu0 0.0
        %604 = vmatpush1.msra.mxu0 %v388
        %605 = vmatprep.subr.mxu0 0.0
        %606 = vmatpush2.msra.mxu0 %v419
        %607 = vmatprep.subr.mxu0 0.0
        %608 = vmatpush2.msra.mxu0 %v418
        %609 = vmatprep.subr.mxu0 0.0
        %610 = vmatpush2.msra.mxu0 %v417
        %611 = vmatprep.subr.mxu0 0.0
        %612 = vmatpush2.msra.mxu0 %v416
        %613 = vmatprep.subr.mxu0 0.0
        %614 = vmatpush2.msra.mxu0 %v415
        %615 = vmatprep.subr.mxu0 0.0
        %616 = vmatpush2.msra.mxu0 %v414
        %617 = vmatprep.subr.mxu0 0.0
        %618 = vmatpush2.msra.mxu0 %v413
        %619 = vmatprep.subr.mxu0 0.0
        %620 = vmatpush2.msra.mxu0 %v412
        %621 = vmatprep.subr.mxu0 0.0
        %622 = vmatpush2.msra.mxu0 %v411
        %623 = vmatprep.subr.mxu0 0.0
        %624 = vmatpush2.msra.mxu0 %v410
        %625 = vmatprep.subr.mxu0 0.0
        %626 = vmatpush2.msra.mxu0 %v409
        %627 = vmatprep.subr.mxu0 0.0
        %628 = vmatpush2.msra.mxu0 %v408
        %629 = vmatprep.subr.mxu0 0.0
        %630 = vmatpush2.msra.mxu0 %v407
        %631 = vmatprep.subr.mxu0 0.0
        %632 = vmatpush2.msra.mxu0 %v406
        %633 = vmatprep.subr.mxu0 0.0
        %634 = vmatpush2.msra.mxu0 %v405
        %635 = vmatprep.subr.mxu0 0.0
        %636 = vmatpush2.msra.mxu0 %v404
        %637 = vmatprep.mubr.f32.mxu0 %v557
        %638 = vmatmul.mubr.f32.gmra.mxu0 %v525
        %v639 = vpop.f32.mrf.mxu0
        %v640 = vadd.f32 0.0, %v639
        %v641 = vpop.f32.mrf.mxu0
        %642 = vmatprep.mubr.f32.mxu0 %v558
        %643 = vmatmul.mubr.f32.gmra.mxu0 %v526
        %v644 = vpop.f32.mrf.mxu0
        %v645 = vadd.f32 0.0, %v644
        %v646 = vpop.f32.mrf.mxu0
        %647 = vmatprep.mubr.f32.mxu0 %v559
        %648 = vmatmul.mubr.f32.gmra.mxu0 %v527
        %v649 = vpop.f32.mrf.mxu0
        %v650 = vadd.f32 0.0, %v649
        %v651 = vpop.f32.mrf.mxu0
        %652 = vmatprep.mubr.f32.mxu0 %v560
        %653 = vmatmul.mubr.f32.gmra.mxu0 %v528
        %v654 = vpop.f32.mrf.mxu0
        %v655 = vadd.f32 0.0, %v654
        %v656 = vpop.f32.mrf.mxu0
        %657 = vdwg.mxu0
        %v658 = vadd.f32 %v505, %v640
        %v659 = vadd.f32 %v506, %v645
        %v660 = vadd.f32 %v507, %v650
        %v661 = vadd.f32 %v508, %v655
        %vm662 = vcmask 261120
        %663 = vst.msk [vmem:[%s329] sm:$0xff] %vm662, %v658
        %664 = vst.msk [vmem:[%s329 + $0x8] sm:$0xff] %vm662, %v659
        %665 = vst.msk [vmem:[%s329 + $0x10] sm:$0xff] %vm662, %v660
        %666 = vst.msk [vmem:[%s329 + $0x18] sm:$0xff] %vm662, %v661
        %s667 = sand.u32 %s163, 1
        %s668 = scalar_lea.sflag [#allocation3], %s667
        %s669 = sand.u32 %s163, 1
        %s670 = smul.addr %s669, 2
        %s671 = scalar_lea.vmem [#allocation2], %s670
        %s672 = sand.u32 %s189, 1
        %s673 = scalar_lea.sflag [#allocation5], %s672
        %s674 = sand.u32 %s189, 1
        %s675 = smul.addr %s674, 32
        %s676 = scalar_lea.vmem [#allocation4], %s675
        // Predicated region
        $region41: #{tpu_custom_call.1} parent=35 // pred_check
          %p677 = pneg %p173
        $region42: #{tpu_custom_call.1} parent=35 // pred_check_branch
          %679 = sbr.rel (%p677) target = $region44
        $region43: #{tpu_custom_call.1} parent=35 // pred_region
          %s681 = ssub.s32 32, 32
          %682 = vsyncadd %s668, %s681
          %s683 = smul.addr %s27, 32
          %s684 = scalar_lea.hbm %s4, %s683
          %s686 = sshll.u32 %s671, 4
          %s687 = int_to_ptr.vmem [resolvable:$true] %s686
          %689 = dma.vmem_to_hbm [thread:$0]  %s687, 32, %s684, %s668
        $region44: #{tpu_custom_call.1} parent=35 // pred_fallthru
          _
        // Predicated region
        $region45: #{tpu_custom_call.1} parent=35 // pred_check
          %p690 = pneg %p199
        $region46: #{tpu_custom_call.1} parent=35 // pred_check_branch
          %692 = sbr.rel (%p690) target = $region48
        $region47: #{tpu_custom_call.1} parent=35 // pred_region
          %s694 = ssub.s32 512, 512
          %695 = vsyncadd %s673, %s694
          %s696 = smul.addr %s27, 4
          %s697 = smul.addr %s696, 128
          %s698 = scalar_lea.hbm %s5, %s697
          %s699 = sshll.u32 %s676, 4
          %s700 = int_to_ptr.vmem [resolvable:$true] %s699
          %705 = dma.vmem_to_hbm [thread:$0]  %s700, 512, %s698, %s673, 128, 128, 8
        $region48: #{tpu_custom_call.1} parent=35 // pred_fallthru
          _
      $region36: #{tpu_custom_call.1} parent=5 // pred_fallthru
        _
      %p706 = scmp.le.s32.totalorder 2, %s18
      // Predicated region
      $region49: #{tpu_custom_call.1} parent=5 // pred_check
        %p707 = pneg %p706
      $region50: #{tpu_custom_call.1} parent=5 // pred_check_branch
        %709 = sbr.rel (%p707) target = $region52
      $region51: #{tpu_custom_call.1} parent=5 // pred_region
        %s710 = ssub.s32 %s18, 2
        // Predicated region
        $region53: #{tpu_custom_call.1} parent=51 // pred_check
          %p711 = pneg %p179
        $region54: #{tpu_custom_call.1} parent=51 // pred_check_branch
          %713 = sbr.rel (%p711) target = $region56
        $region55: #{tpu_custom_call.1} parent=51 // pred_region
          %s714 = sand.u32 %s164, 1
          %s715 = scalar_lea.sflag [#allocation3], %s714
          %s716 = sand.u32 %s164, 1
          %s717 = smul.addr %s716, 2
          %s718 = scalar_lea.vmem [#allocation2], %s717
          %719 = dma.done %s715, 32
        $region56: #{tpu_custom_call.1} parent=51 // pred_fallthru
          _
        // Predicated region
        $region57: #{tpu_custom_call.1} parent=51 // pred_check
          %p720 = pneg %p205
        $region58: #{tpu_custom_call.1} parent=51 // pred_check_branch
          %722 = sbr.rel (%p720) target = $region60
        $region59: #{tpu_custom_call.1} parent=51 // pred_region
          %s723 = sand.u32 %s190, 1
          %s724 = scalar_lea.sflag [#allocation5], %s723
          %s725 = sand.u32 %s190, 1
          %s726 = smul.addr %s725, 32
          %s727 = scalar_lea.vmem [#allocation4], %s726
          %728 = dma.done %s724, 512
        $region60: #{tpu_custom_call.1} parent=51 // pred_fallthru
          _
      $region52: #{tpu_custom_call.1} parent=5 // pred_fallthru
        _
    $region6: #{tpu_custom_call.1} parent=1 // loop_footer
      %s22 = sadd.s32 1, %s18
    $region7: #{tpu_custom_call.1} parent=1 // loop_footer_branch
      %17 = sbr.rel target = $region3
    $region8: #{tpu_custom_call.1} parent=1 // loop_exit
      _
    %729 = vsyncpa [#allocation3], 1
    %s730 = scalar_lea.sflag [#allocation3], 1
    %731 = vsyncpa %s730, 1
    %732 = vsyncpa [#allocation5], 1
    %s733 = scalar_lea.sflag [#allocation5], 1
    %734 = vsyncpa %s733, 1

</llo_original>
